<compile_context>
chip_gen: v5e
topology: v5e:2x2
jax: 0.10.0
libtpu: 0.0.40
codegen_flags: <defaults>
</compile_context>

<pallas_src>
import jax
import jax.numpy as jnp
from jax.experimental import pallas as pl
from jax.experimental.pallas import tpu as pltpu


def learnable_bias_kernel(x_ref, b_ref, o_ref):
    # x_ref: (tn, tl) activation tile, lanes are a dense slice of C*H*W.
    # b_ref: (1, tl) per-lane bias row -> broadcast across sublanes (cheap).
    o_ref[...] = x_ref[...] + b_ref[...]


def learnable_bias_forward(
    x,
    bias,
    *,
    target_tile_bytes=8 << 20,     # ~8 MiB per tile -> 2*(in+out) = 32 MiB live
    vmem_limit_bytes=48 << 20,     # fits v7x's 64 MiB, lifts v5e's 16 MiB default
    donate_x=False,                # alias x's HBM buffer for the output
):
    """LearnableBias forward: out = x + bias.reshape(1, C, 1, 1)."""
    N, C, H, W = x.shape
    L = C * H * W
    itemsize = jnp.dtype(x.dtype).itemsize
    sub = max(8, 32 // itemsize)   # native sublane multiple: f32 8, bf16 16, i8 32

    # Free contiguous-collapse reshape (no copy); rows = batch, lanes = C*H*W.
    x2 = x.reshape(N, L)
    # Tiny (1, C*H*W) bias row: bias[c] repeated H*W times per channel.
    b_row = jnp.repeat(bias.reshape(C).astype(x.dtype), H * W).reshape(1, L)

    # ---- tile sizing (lane-dense first, then rows from the byte budget) ----
    if sub * L * itemsize <= target_tile_bytes:
        # A full-width stripe fits: take all lanes, size rows from the budget.
        tl = L
        rows_budget = max(sub, (target_tile_bytes // (L * itemsize)) // sub * sub)
        tn = N if N <= rows_budget else rows_budget
    else:
        # Huge C*H*W: one sublane-multiple of rows, tile lanes in 128s.
        tn = N if N < sub else sub
        lane_budget = target_tile_bytes // (tn * itemsize)
        tl = L if lane_budget >= L else max(128, (lane_budget // 128) * 128)

    # Lane-tile axis outer, row-tile axis inner: the bias block index (0, j)
    # is constant along the inner axis, so Pallas skips its re-fetch.
    grid = (pl.cdiv(L, tl), pl.cdiv(N, tn))

    out = pl.pallas_call(
        learnable_bias_kernel,
        out_shape=jax.ShapeDtypeStruct((N, L), x.dtype),
        grid_spec=pltpu.PrefetchScalarGridSpec(
            num_scalar_prefetch=0,
            grid=grid,
            in_specs=[
                pl.BlockSpec((tn, tl), lambda j, i: (i, j)),   # streamed x tile
                pl.BlockSpec((1, tl), lambda j, i: (0, j)),    # bias row (no re-fetch)
            ],
            out_specs=pl.BlockSpec((tn, tl), lambda j, i: (i, j)),
        ),
        compiler_params=pltpu.CompilerParams(
            dimension_semantics=("parallel", "parallel"),
            vmem_limit_bytes=vmem_limit_bytes,
        ),
        input_output_aliases=({0: 0} if donate_x else {}),
    )(x2, b_row)

    return out.reshape(N, C, H, W)


def learnable_bias_reference(x, bias):
    """Pure-JAX reference mirroring the PyTorch forward."""
    C = x.shape[1]
    return x + bias.reshape(1, C, 1, 1).astype(x.dtype)


def _check(x, bias, **kwargs):
    out = jax.block_until_ready(learnable_bias_forward(x, bias, **kwargs))
    ref = learnable_bias_reference(x, bias)
    assert out.shape == x.shape
    assert out.dtype == x.dtype
    tol = 1e-6 if x.dtype == jnp.float32 else 1e-2
    assert jnp.allclose(out.astype(jnp.float32), ref.astype(jnp.float32),
                        rtol=tol, atol=tol), "mismatch vs JAX reference"


if __name__ == "__main__":
    key = jax.random.PRNGKey(0)
    k_x, k_b, k_x2, k_b2, k_x3, k_b3 = jax.random.split(key, 6)

    # Main small config consistent with LearnableBias(out_chn=4).
    N, C, H, W = 2, 4, 16, 16
    x = jax.random.normal(k_x, (N, C, H, W), dtype=jnp.float32)
    # Parameter is initialized to zero in PyTorch; use nonzero values so the
    # add path is actually exercised (forward semantics are identical).
    bias = 0.1 * jax.random.normal(k_b, (1, C, 1, 1), dtype=jnp.float32)
    _check(x, bias)

    # Row-tiled case with a non-divisible row grid (exercises partial-block
    # masking without any wrapper-side pad/slice copies).
    x_t = jax.random.normal(k_x2, (10, 8, 8, 8), dtype=jnp.float32)
    b_t = 0.1 * jax.random.normal(k_b2, (1, 8, 1, 1), dtype=jnp.float32)
    _check(x_t, b_t, target_tile_bytes=8 * 8 * 8 * 8 * 4)   # forces tn=8 < N=10

    # bf16 small-spatial case (sublane multiple 16, lane-dense C*H*W layout).
    x_s = jax.random.normal(k_x3, (3, 4, 2, 2), dtype=jnp.bfloat16)
    b_s = (0.1 * jax.random.normal(k_b3, (1, 4, 1, 1))).astype(jnp.bfloat16)
    _check(x_s, b_s)

    print("KERNEL_OK")
</pallas_src>

<mosaic_0001>
module attributes {stable_mosaic.version = 11 : i64} {
  func.func @learnable_bias_kernel(%arg0: i32, %arg1: i32, %arg2: memref<2x1024xf32, #tpu.memory_space<vmem>>, %arg3: memref<1x1024xf32, #tpu.memory_space<vmem>>, %arg4: memref<2x1024xf32, #tpu.memory_space<vmem>>) attributes {dimension_semantics = [#tpu.dimension_semantics<parallel>, #tpu.dimension_semantics<parallel>], iteration_bounds = array<i64: 1, 1>, scalar_prefetch = 0 : i64, scratch_operands = 0 : i64, tpu.core_type = #tpu.core_type<tc>, window_params = [{transform_indices = @transform_0, window_bounds = array<i64: 2, 1024>}, {transform_indices = @transform_1, window_bounds = array<i64: 1, 1024>}, {transform_indices = @transform_2, window_bounds = array<i64: 2, 1024>}]} {
    %c0 = arith.constant 0 : index
    %c0_0 = arith.constant 0 : index
    %0 = vector.load %arg2[%c0, %c0_0] : memref<2x1024xf32, #tpu.memory_space<vmem>>, vector<2x1024xf32>
    %c0_1 = arith.constant 0 : index
    %c0_2 = arith.constant 0 : index
    %1 = vector.load %arg3[%c0_1, %c0_2] : memref<1x1024xf32, #tpu.memory_space<vmem>>, vector<1x1024xf32>
    %2 = vector.broadcast %1 : vector<1x1024xf32> to vector<2x1024xf32>
    %3 = arith.addf %0, %2 : vector<2x1024xf32>
    %c0_3 = arith.constant 0 : index
    %c0_4 = arith.constant 0 : index
    %4 = vector.load %arg4[%c0_3, %c0_4] : memref<2x1024xf32, #tpu.memory_space<vmem>>, vector<2x1024xf32>
    tpu.vector_store %arg4[%c0_3, %c0_4], %3 {strides = array<i32>} : memref<2x1024xf32, #tpu.memory_space<vmem>>, vector<2x1024xf32>,
    return
  }
  func.func @transform_0(%arg0: i32, %arg1: i32) -> (i32, i32) {
    %c0_i32 = arith.constant 0 : i32
    return %arg1, %arg0 : i32, i32
  }
  func.func @transform_1(%arg0: i32, %arg1: i32) -> (i32, i32) {
    %c0_i32 = arith.constant 0 : i32
    %c0_i32_0 = arith.constant 0 : i32
    return %c0_i32, %arg0 : i32, i32
  }
  func.func @transform_2(%arg0: i32, %arg1: i32) -> (i32, i32) {
    %c0_i32 = arith.constant 0 : i32
    return %arg1, %arg0 : i32, i32
  }
}

</mosaic_0001>

<llo_original>
// kernel: tpu_custom_call.1
$region0: #{tpu_custom_call.1}
  #allocation0 [shape = 'u32[]', space=smem, size = 0x4, offset = 0x4, fixed_abs, tag = 'smem constant byte address 0x4 - core index']
  #allocation1 [shape = 'u32[72,128]{1,0:T(1,128)}', space=vmem, size = 0x9000, scoped, tag = 'internal scratch']
  %s0 = inlined_call_operand.hbm [shape: f32[2,1024], index: 0, kind: input, shape index: {}]
  %s1 = inlined_call_operand.hbm [shape: f32[1,1024], index: 1, kind: input, shape index: {}]
  %s2 = inlined_call_operand.hbm [shape: f32[2,1024], index: 2, kind: output, shape index: {}]
  %s3 = sld [smem:[#allocation0]]
  $region26: #{tpu_custom_call.1} parent=0
    _
  %s5 = ssub.s32 1, %s3
  %s6 = scalar_select 0, %s5, %s3
  $region1: #{tpu_custom_call.1} parent=0
    #allocation2 [shape = 'u8[8192]{0}', space=vmem, size = 0x2000, scoped, tag = 'input window, operand 0, single buffered']
    #allocation3 [shape = 's32[1]{0}', space=sflag, size = 0x4, scoped, tag = 'scoped memory for tpu_custom_call.1']
    #allocation4 [shape = 's32[1]{0}', space=sflag, size = 0x4, scoped, tag = 'scoped memory for tpu_custom_call.1']
    #allocation5 [shape = 'u8[4096]{0}', space=vmem, size = 0x1000, scoped, tag = 'input window, operand 1, single buffered']
    #allocation6 [shape = 's32[1]{0}', space=sflag, size = 0x4, scoped, tag = 'scoped memory for tpu_custom_call.1']
    #allocation7 [shape = 'u8[8192]{0}', space=vmem, size = 0x2000, scoped, tag = 'output window, operand 0, single buffered']
    %7 = vsyncpa [#allocation3], 0
    %8 = vsyncpa [#allocation6], 0
    %9 = vsyncpa [#allocation4], 0
    // Predicated region
    $region2: #{tpu_custom_call.1} parent=1 // pred_check
      _
    $region3: #{tpu_custom_call.1} parent=1 // pred_check_branch
      %11 = sbr.rel (0) target = $region5
    $region4: #{tpu_custom_call.1} parent=1 // pred_region
      %13 = vsyncadd [#allocation3], 0
      %s15 = sshll.u32 %s0, 4
      %s16 = int_to_ptr.hbm [resolvable:$true] %s15
      %s17 = sshll.u32 [#allocation2], 4
      %s18 = int_to_ptr.vmem [resolvable:$true] %s17
      %20 = dma.hbm_to_vmem [thread:$0]  %s16, 256, %s18, [#allocation3]
    $region5: #{tpu_custom_call.1} parent=1 // pred_fallthru
      _
    // Predicated region
    $region6: #{tpu_custom_call.1} parent=1 // pred_check
      _
    $region7: #{tpu_custom_call.1} parent=1 // pred_check_branch
      %22 = sbr.rel (0) target = $region9
    $region8: #{tpu_custom_call.1} parent=1 // pred_region
      %24 = vsyncadd [#allocation6], 0
      %s26 = sshll.u32 %s1, 4
      %s27 = int_to_ptr.hbm [resolvable:$true] %s26
      %s28 = sshll.u32 [#allocation5], 4
      %s29 = int_to_ptr.vmem [resolvable:$true] %s28
      %31 = dma.hbm_to_vmem [thread:$0]  %s27, 128, %s29, [#allocation6]
    $region9: #{tpu_custom_call.1} parent=1 // pred_fallthru
      _
    // Predicated region
    $region10: #{tpu_custom_call.1} parent=1 // pred_check
      _
    $region11: #{tpu_custom_call.1} parent=1 // pred_check_branch
      %33 = sbr.rel (0) target = $region13
    $region12: #{tpu_custom_call.1} parent=1 // pred_region
      %35 = dma.done [#allocation3], 256
    $region13: #{tpu_custom_call.1} parent=1 // pred_fallthru
      _
    // Predicated region
    $region14: #{tpu_custom_call.1} parent=1 // pred_check
      _
    $region15: #{tpu_custom_call.1} parent=1 // pred_check_branch
      %37 = sbr.rel (0) target = $region17
    $region16: #{tpu_custom_call.1} parent=1 // pred_region
      %39 = dma.done [#allocation6], 128
    $region17: #{tpu_custom_call.1} parent=1 // pred_fallthru
      _
    %v40 = vld [vmem:[#allocation2] sm:$0xff]
    %v41 = vld [vmem:[#allocation2 + $0x8] sm:$0xff]
    %v42 = vld [vmem:[#allocation5] sm:$0xff]
    %v44 = vperm.slane %v42, 0
    %v45 = vperm.slane %v42, 1
    %v46 = vperm.slane %v42, 2
    %v47 = vperm.slane %v42, 3
    %v48 = vperm.slane %v42, 4
    %v49 = vperm.slane %v42, 5
    %v50 = vperm.slane %v42, 6
    %v51 = vperm.slane %v42, 7
    %v52 = vrot.slane %v45, 6
    %v53 = vrot.slane %v46, 4
    %v54 = vrot.slane %v47, 2
    %v55 = vrot.slane %v49, 6
    %v56 = vrot.slane %v50, 4
    %v57 = vrot.slane %v51, 2
    %vm58 = vcmask 1041408
    %v59 = vsel %vm58, %v44, %v52
    %vm60 = vcmask 1045508
    %v61 = vsel %vm60, %v53, %v54
    %vm62 = vcmask 1043456
    %v63 = vsel %vm62, %v59, %v61
    %v64 = vsel %vm58, %v48, %v55
    %v65 = vsel %vm60, %v56, %v57
    %v66 = vsel %vm62, %v64, %v65
    %v69 = vadd.f32 %v40, %v63
    %v70 = vadd.f32 %v41, %v66
    %71 = vst [vmem:[#allocation7] sm:$0xff] %v69
    %72 = vst [vmem:[#allocation7 + $0x8] sm:$0xff] %v70
    // Predicated region
    $region18: #{tpu_custom_call.1} parent=1 // pred_check
      _
    $region19: #{tpu_custom_call.1} parent=1 // pred_check_branch
      %74 = sbr.rel (0) target = $region21
    $region20: #{tpu_custom_call.1} parent=1 // pred_region
      %76 = vsyncadd [#allocation4], 0
      %s78 = sshll.u32 [#allocation7], 4
      %s79 = int_to_ptr.vmem [resolvable:$true] %s78
      %s80 = sshll.u32 %s2, 4
      %s81 = int_to_ptr.hbm [resolvable:$true] %s80
      %83 = dma.vmem_to_hbm [thread:$0]  %s79, 256, %s81, [#allocation4]
    $region21: #{tpu_custom_call.1} parent=1 // pred_fallthru
      _
    // Predicated region
    $region22: #{tpu_custom_call.1} parent=1 // pred_check
      _
    $region23: #{tpu_custom_call.1} parent=1 // pred_check_branch
      %85 = sbr.rel (0) target = $region25
    $region24: #{tpu_custom_call.1} parent=1 // pred_region
      %87 = dma.done [#allocation4], 256
    $region25: #{tpu_custom_call.1} parent=1 // pred_fallthru
      _
    %88 = vsyncpa [#allocation3], 1
    %89 = vsyncpa [#allocation6], 1
    %90 = vsyncpa [#allocation4], 1

</llo_original>
